<compile_context>
chip_gen: v6e
topology: v6e:2x2x1
jax: 0.10.0
libtpu: 0.0.40
codegen_flags: <defaults>
</compile_context>

<pallas_src>
import functools

import jax
import jax.numpy as jnp
from jax.experimental import pallas as pl
from jax.experimental.pallas import tpu as pltpu


def _round_up(x, m):
    return ((x + m - 1) // m) * m


# ----------------------------------------------------------------- kernels
def _finalize(y_packed, *, n_members, to, inv_e, out_dtype):
    """ReLU + group-reduce over ensemble members packed along lanes.

    y_packed: (tb, n_members * to) f32 with bias already added; member e owns
    lanes [e*to, (e+1)*to) (to is a multiple of 128 -> vreg-aligned slices).
    """
    y = jnp.maximum(y_packed, 0.0)
    out = y[:, 0:to]
    for e in range(1, n_members):          # static unroll, aligned lane slices
        out = out + y[:, e * to:(e + 1) * to]
    return (out * jnp.float32(inv_e)).astype(out_dtype)


def _fused_kernel(x_ref, w_ref, b_ref, o_ref, *, n_members, to, inv_e):
    """Single-K-step path: one packed matmul, bias, ReLU, group reduce, store."""
    y = jnp.dot(x_ref[...], w_ref[...], preferred_element_type=jnp.float32)
    y = y + b_ref[...]
    o_ref[...] = _finalize(y, n_members=n_members, to=to, inv_e=inv_e,
                           out_dtype=o_ref.dtype)


def _ktiled_kernel(x_ref, w_ref, b_ref, o_ref, acc_ref, *, n_members, to, inv_e):
    """K-tiled path: accumulate packed partials in f32 VMEM, finalize at last k."""
    k = pl.program_id(2)
    nk = pl.num_programs(2)
    part = jnp.dot(x_ref[...], w_ref[...], preferred_element_type=jnp.float32)

    @pl.when(k == 0)
    def _():
        acc_ref[...] = part            # store (no zero-init + RMW pass)

    @pl.when(k != 0)
    def _():
        acc_ref[...] += part

    @pl.when(k == nk - 1)
    def _():
        y = acc_ref[...] + b_ref[...]
        o_ref[...] = _finalize(y, n_members=n_members, to=to, inv_e=inv_e,
                               out_dtype=o_ref.dtype)


# ------------------------------------------------------------ weight packing
def prepare_ensemble_params(w, b, typ, *, use_bf16_matmul=True):
    """Pack (and, for 'score', pre-average) ensemble weights ONCE.

    Args:
      w: [E, I, O] float32 (member e computes x @ w[e] + b[e])
      b: [E, O]   float32
      typ: 'prob' or 'score'
      use_bf16_matmul: cast packed weights (and x at apply time) to bf16 for
        the MXU; accumulation / bias / ReLU stay f32.
    Returns:
      dict of packed arrays + static tiling metadata, reusable across calls.
    """
    if typ not in ("prob", "score"):
        raise NotImplementedError("Choose type from {'score', 'prob'}")
    E, I, O = w.shape
    assert b.shape == (E, O)

    w = w.astype(jnp.float32)
    b = b.astype(jnp.float32)
    if typ == "score":
        # mean_e(x @ W_e + b_e) == x @ mean(W) + mean(b): a 1-member ensemble.
        w = jnp.mean(w, axis=0, keepdims=True)
        b = jnp.mean(b, axis=0, keepdims=True)
    n_members = w.shape[0]
    inv_e = 1.0 / n_members                      # == 1.0 for 'score'

    mm_dtype = jnp.bfloat16 if use_bf16_matmul else jnp.float32
    wsz = jnp.dtype(mm_dtype).itemsize

    # --- padded geometry -----------------------------------------------------
    o_pad = _round_up(O, 128)                    # lane-dense outputs
    i_pad = _round_up(I, 128) if I > 512 else I  # small I: full-extent block is legal

    # Output tile: largest 128-multiple keeping the packed weight block modest.
    to = 128
    for cand in (512, 256, 128):
        if o_pad % cand == 0 and n_members * cand * wsz * min(i_pad, 512) <= (2 << 20):
            to = cand
            break
    # K tile: largest 128-multiple of i_pad with weight block <= ~2 MiB/buffer.
    tk = i_pad
    if i_pad % 128 == 0:
        for cand in (512, 256, 128):
            if i_pad % cand == 0 and cand * n_members * to * wsz <= (2 << 20):
                tk = cand
                break
    n_ot = o_pad // to
    nk = i_pad // tk

    # --- pack: (E, I, O) -> (I_pad, n_ot * E * to), member groups contiguous
    # within each output tile so in-kernel group slices are 128-lane aligned.
    w_p = jnp.pad(w, ((0, 0), (0, i_pad - I), (0, o_pad - O)))
    w_p = w_p.reshape(n_members, i_pad, n_ot, to)
    w_p = w_p.transpose(1, 2, 0, 3).reshape(i_pad, n_ot * n_members * to)
    b_p = jnp.pad(b, ((0, 0), (0, o_pad - O)))
    b_p = b_p.reshape(n_members, n_ot, to).transpose(1, 0, 2)
    b_p = b_p.reshape(1, n_ot * n_members * to)

    return dict(
        w_packed=w_p.astype(mm_dtype),
        b_packed=b_p,                             # f32
        n_members=n_members, inv_e=inv_e,
        I=I, O=O, i_pad=i_pad, o_pad=o_pad,
        to=to, tk=tk, n_ot=n_ot, nk=nk,
        mm_dtype=mm_dtype,
    )


# ------------------------------------------------------------------- forward
def ensemble_layer_apply(x, params):
    """x: [B, I] -> [B, O] float32 using prepared (packed) parameters."""
    B, I = x.shape
    assert I == params["I"]
    i_pad, o_pad = params["i_pad"], params["o_pad"]
    to, tk, n_ot, nk = params["to"], params["tk"], params["n_ot"], params["nk"]
    n_members, inv_e = params["n_members"], params["inv_e"]
    w_p, b_p = params["w_packed"], params["b_packed"]
    mm_dtype = params["mm_dtype"]

    # Pad the batch to a sublane multiple and pick the batch tile.
    b_pad = _round_up(B, 8)
    if b_pad > 256:
        tb = 256
        b_pad = _round_up(b_pad, tb)
    else:
        tb = b_pad
    nb = b_pad // tb

    x_p = jnp.pad(x.astype(mm_dtype), ((0, b_pad - B), (0, i_pad - I)))

    e_to = n_members * to
    isz = jnp.dtype(mm_dtype).itemsize
    # Double-buffered input blocks + double-buffered output + f32 accumulator.
    vmem_needed = (2 * (tb * tk * isz + tk * e_to * isz + e_to * 4)
                   + 2 * (tb * to * 4)
                   + (tb * e_to * 4 if nk > 1 else 0))
    vmem_limit = int(min(max(2 * vmem_needed, 32 << 20), 48 << 20))

    if nk == 1:
        kernel = functools.partial(_fused_kernel, n_members=n_members, to=to,
                                   inv_e=inv_e)
        grid_spec = pltpu.PrefetchScalarGridSpec(
            num_scalar_prefetch=0,
            grid=(nb, n_ot),
            in_specs=[
                pl.BlockSpec((tb, tk), lambda i, j: (i, 0)),
                pl.BlockSpec((tk, e_to), lambda i, j: (0, j)),
                pl.BlockSpec((1, e_to), lambda i, j: (0, j)),
            ],
            out_specs=pl.BlockSpec((tb, to), lambda i, j: (i, j)),
        )
        dims = ("parallel", "parallel")
    else:
        kernel = functools.partial(_ktiled_kernel, n_members=n_members, to=to,
                                   inv_e=inv_e)
        grid_spec = pltpu.PrefetchScalarGridSpec(
            num_scalar_prefetch=0,
            grid=(nb, n_ot, nk),
            in_specs=[
                pl.BlockSpec((tb, tk), lambda i, j, k: (i, k)),
                pl.BlockSpec((tk, e_to), lambda i, j, k: (k, j)),
                pl.BlockSpec((1, e_to), lambda i, j, k: (0, j)),
            ],
            out_specs=pl.BlockSpec((tb, to), lambda i, j, k: (i, j)),
            scratch_shapes=[pltpu.VMEM((tb, e_to), jnp.float32)],
        )
        dims = ("parallel", "parallel", "arbitrary")

    out = pl.pallas_call(
        kernel,
        out_shape=jax.ShapeDtypeStruct((b_pad, o_pad), jnp.float32),
        grid_spec=grid_spec,
        compiler_params=pltpu.CompilerParams(
            dimension_semantics=dims,
            vmem_limit_bytes=vmem_limit,
        ),
    )(x_p, w_p, b_p)
    return out[:B, :params["O"]]


def ensemble_layer(x, w, b, typ: str = "prob", *, use_bf16_matmul: bool = True):
    """One-shot convenience wrapper.  Re-packs weights each call; for repeated
    calls use prepare_ensemble_params() once + ensemble_layer_apply()."""
    params = prepare_ensemble_params(w, b, typ, use_bf16_matmul=use_bf16_matmul)
    return ensemble_layer_apply(x, params)


# ------------------------------------------------------------------ reference
def _reference(x, w, b, typ):
    ys = jnp.einsum("bi,eio->ebo", x, w) + b[:, None, :]      # (E, B, O)
    if typ == "prob":
        return jnp.mean(jnp.maximum(ys, 0.0), axis=0)
    return jnp.maximum(jnp.mean(ys, axis=0), 0.0)


if __name__ == "__main__":
    def make_inputs(key, B, I, O, E):
        kx, kw, kb = jax.random.split(key, 3)
        x = jax.random.normal(kx, (B, I), dtype=jnp.float32)
        bound = 1.0 / float(I) ** 0.5
        w = jax.random.uniform(kw, (E, I, O), minval=-bound, maxval=bound,
                               dtype=jnp.float32)
        b = jax.random.uniform(kb, (E, O), minval=-bound, maxval=bound,
                               dtype=jnp.float32)
        return x, w, b

    ok = True
    key = jax.random.PRNGKey(0)
    k1, k2 = jax.random.split(key)

    # Case 1: module-sized demo (batch=2, input_size=32, output_size=8, E=5).
    x, w, b = make_inputs(k1, B=2, I=32, O=8, E=5)
    for typ in ("prob", "score"):
        ref = _reference(x, w, b, typ)
        # f32 matmul path: tight tolerance vs. the f32 reference.
        params = prepare_ensemble_params(w, b, typ, use_bf16_matmul=False)
        out = jax.block_until_ready(ensemble_layer_apply(x, params))
        ok &= bool(jnp.allclose(out, ref, atol=1e-5, rtol=1e-5))
        # Default bf16 matmul path: looser tolerance (reduced-precision MXU).
        out_bf16 = jax.block_until_ready(ensemble_layer(x, w, b, typ))
        ok &= bool(jnp.allclose(out_bf16, ref, atol=3e-2, rtol=3e-2))

    # Case 2: exercises K-tiling, packed-N tiling, and O/B padding + slicing.
    x, w, b = make_inputs(k2, B=16, I=1024, O=300, E=4)
    for typ in ("prob", "score"):
        ref = _reference(x, w, b, typ)
        params = prepare_ensemble_params(w, b, typ, use_bf16_matmul=False)
        out = jax.block_until_ready(ensemble_layer_apply(x, params))
        ok &= bool(jnp.allclose(out, ref, atol=1e-2, rtol=1e-2))

    if ok:
        print("KERNEL_OK")
</pallas_src>

<mosaic_0001>
module attributes {stable_mosaic.version = 11 : i64} {
  func.func @_fused_kernel(%arg0: i32, %arg1: i32, %arg2: memref<8x32xf32, #tpu.memory_space<vmem>>, %arg3: memref<32x640xf32, #tpu.memory_space<vmem>>, %arg4: memref<1x640xf32, #tpu.memory_space<vmem>>, %arg5: memref<8x128xf32, #tpu.memory_space<vmem>>) attributes {dimension_semantics = [#tpu.dimension_semantics<parallel>, #tpu.dimension_semantics<parallel>], iteration_bounds = array<i64: 1, 1>, scalar_prefetch = 0 : i64, scratch_operands = 0 : i64, tpu.core_type = #tpu.core_type<tc>, window_params = [{transform_indices = @transform_0, window_bounds = array<i64: 8, 32>}, {transform_indices = @transform_1, window_bounds = array<i64: 32, 640>}, {transform_indices = @transform_2, window_bounds = array<i64: 1, 640>}, {transform_indices = @transform_3, window_bounds = array<i64: 8, 128>}]} {
    %c0 = arith.constant 0 : index
    %c0_0 = arith.constant 0 : index
    %0 = vector.load %arg2[%c0, %c0_0] : memref<8x32xf32, #tpu.memory_space<vmem>>, vector<8x32xf32>
    %c0_1 = arith.constant 0 : index
    %c0_2 = arith.constant 0 : index
    %1 = vector.load %arg3[%c0_1, %c0_2] : memref<32x640xf32, #tpu.memory_space<vmem>>, vector<32x640xf32>
    %cst = arith.constant dense<0.000000e+00> : vector<8x640xf32>
    %2 = tpu.matmul %0, %1, %cst {dimension_numbers = #tpu.dot_dimension_numbers<[1], [0], [0], [1], [0, 0, 1, 1], [], []>} : vector<8x32xf32>, vector<32x640xf32>, vector<8x640xf32> -> vector<8x640xf32>
    %c0_3 = arith.constant 0 : index
    %c0_4 = arith.constant 0 : index
    %3 = vector.load %arg4[%c0_3, %c0_4] : memref<1x640xf32, #tpu.memory_space<vmem>>, vector<1x640xf32>
    %4 = vector.broadcast %3 : vector<1x640xf32> to vector<8x640xf32>
    %5 = arith.addf %2, %4 : vector<8x640xf32>
    %cst_5 = arith.constant 0.000000e+00 : f32
    %6 = vector.broadcast %cst_5 : f32 to vector<8x640xf32>
    %7 = arith.maximumf %5, %6 : vector<8x640xf32>
    %8 = vector.extract_strided_slice %7 {offsets = [0, 0], sizes = [8, 128], strides = [1, 1]} : vector<8x640xf32> to vector<8x128xf32>
    %9 = vector.extract_strided_slice %7 {offsets = [0, 128], sizes = [8, 128], strides = [1, 1]} : vector<8x640xf32> to vector<8x128xf32>
    %10 = arith.addf %8, %9 : vector<8x128xf32>
    %11 = vector.extract_strided_slice %7 {offsets = [0, 256], sizes = [8, 128], strides = [1, 1]} : vector<8x640xf32> to vector<8x128xf32>
    %12 = arith.addf %10, %11 : vector<8x128xf32>
    %13 = vector.extract_strided_slice %7 {offsets = [0, 384], sizes = [8, 128], strides = [1, 1]} : vector<8x640xf32> to vector<8x128xf32>
    %14 = arith.addf %12, %13 : vector<8x128xf32>
    %15 = vector.extract_strided_slice %7 {offsets = [0, 512], sizes = [8, 128], strides = [1, 1]} : vector<8x640xf32> to vector<8x128xf32>
    %16 = arith.addf %14, %15 : vector<8x128xf32>
    %cst_6 = arith.constant 2.000000e-01 : f32
    %17 = vector.broadcast %cst_6 : f32 to vector<8x128xf32>
    %18 = arith.mulf %16, %17 : vector<8x128xf32>
    %c0_7 = arith.constant 0 : index
    %c0_8 = arith.constant 0 : index
    %19 = vector.load %arg5[%c0_7, %c0_8] : memref<8x128xf32, #tpu.memory_space<vmem>>, vector<8x128xf32>
    tpu.vector_store %arg5[%c0_7, %c0_8], %18 {strides = array<i32>} : memref<8x128xf32, #tpu.memory_space<vmem>>, vector<8x128xf32>,
    return
  }
  func.func @transform_0(%arg0: i32, %arg1: i32) -> (i32, i32) {
    %c0_i32 = arith.constant 0 : i32
    %c0_i32_0 = arith.constant 0 : i32
    return %arg0, %c0_i32 : i32, i32
  }
  func.func @transform_1(%arg0: i32, %arg1: i32) -> (i32, i32) {
    %c0_i32 = arith.constant 0 : i32
    %c0_i32_0 = arith.constant 0 : i32
    return %c0_i32, %arg1 : i32, i32
  }
  func.func @transform_2(%arg0: i32, %arg1: i32) -> (i32, i32) {
    %c0_i32 = arith.constant 0 : i32
    %c0_i32_0 = arith.constant 0 : i32
    return %c0_i32, %arg1 : i32, i32
  }
  func.func @transform_3(%arg0: i32, %arg1: i32) -> (i32, i32) {
    %c0_i32 = arith.constant 0 : i32
    return %arg0, %arg1 : i32, i32
  }
}

</mosaic_0001>

<llo_original>
// kernel: tpu_custom_call.1
$region0: #{tpu_custom_call.1}
  #allocation0 [shape = 'u32[]', space=smem, size = 0x4, offset = 0x4, fixed_abs, tag = 'smem constant byte address 0x4 - core index']
  #allocation1 [shape = 'u32[144,128]{1,0:T(1,128)}', space=vmem, size = 0x12000, scoped, tag = 'internal scratch']
  %s0 = inlined_call_operand.hbm [shape: f32[8,32], index: 0, kind: input, shape index: {}]
  %s1 = inlined_call_operand.hbm [shape: f32[32,640], index: 1, kind: input, shape index: {}]
  %s2 = inlined_call_operand.hbm [shape: f32[1,640], index: 2, kind: input, shape index: {}]
  %s3 = inlined_call_operand.hbm [shape: f32[8,128], index: 3, kind: output, shape index: {}]
  %s4 = sld [smem:[#allocation0]]
  $region34: #{tpu_custom_call.1} parent=0
    _
  %s6 = ssub.s32 1, %s4
  %s7 = scalar_select 0, %s6, %s4
  $region1: #{tpu_custom_call.1} parent=0
    #allocation2 [shape = 'u8[4096]{0}', space=vmem, size = 0x1000, scoped, tag = 'input window, operand 0, single buffered']
    #allocation3 [shape = 's32[1]{0}', space=sflag, size = 0x4, scoped, tag = 'scoped memory for tpu_custom_call.1']
    #allocation4 [shape = 's32[1]{0}', space=sflag, size = 0x4, scoped, tag = 'scoped memory for tpu_custom_call.1']
    #allocation5 [shape = 'u8[81920]{0}', space=vmem, size = 0x14000, scoped, tag = 'input window, operand 1, single buffered']
    #allocation6 [shape = 's32[1]{0}', space=sflag, size = 0x4, scoped, tag = 'scoped memory for tpu_custom_call.1']
    #allocation7 [shape = 'u8[2560]{0}', space=vmem, size = 0xc00, scoped, tag = 'input window, operand 2, single buffered']
    #allocation8 [shape = 'u8[4096]{0}', space=vmem, size = 0x1000, scoped, tag = 'output window, operand 0, single buffered']
    %8 = vsyncpa [#allocation3], 0
    %9 = vsyncpa [#allocation6], 0
    %10 = vsyncpa [#allocation4], 0
    // Predicated region
    $region2: #{tpu_custom_call.1} parent=1 // pred_check
      _
    $region3: #{tpu_custom_call.1} parent=1 // pred_check_branch
      %12 = sbr.rel (0) target = $region5
    $region4: #{tpu_custom_call.1} parent=1 // pred_region
      %s14 = ssub.s32 128, 128
      %15 = vsyncadd [#allocation3], %s14
      %s17 = sshll.u32 [#allocation2], 4
      %s18 = int_to_ptr.vmem [resolvable:$true] %s17
      %20 = dma.hbm_to_vmem [thread:$0]  %s0, 128, %s18, [#allocation3]
    $region5: #{tpu_custom_call.1} parent=1 // pred_fallthru
      _
    // Predicated region
    $region6: #{tpu_custom_call.1} parent=1 // pred_check
      _
    $region7: #{tpu_custom_call.1} parent=1 // pred_check_branch
      %22 = sbr.rel (0) target = $region9
    $region8: #{tpu_custom_call.1} parent=1 // pred_region
      %s24 = ssub.s32 2560, 2560
      %25 = vsyncadd [#allocation6], %s24
      %s26 = sshll.u32 [#allocation5], 4
      %s27 = int_to_ptr.vmem [resolvable:$true] %s26
      %32 = dma.hbm_to_vmem [thread:$0]  %s1, 2560, %s27, [#allocation6], 640, 640, 40
    $region9: #{tpu_custom_call.1} parent=1 // pred_fallthru
      _
    // Predicated region
    $region10: #{tpu_custom_call.1} parent=1 // pred_check
      _
    $region11: #{tpu_custom_call.1} parent=1 // pred_check_branch
      %34 = sbr.rel (0) target = $region13
    $region12: #{tpu_custom_call.1} parent=1 // pred_region
      %s36 = ssub.s32 80, 80
      %37 = vsyncadd [#allocation6], %s36
      %s39 = sshll.u32 [#allocation7], 4
      %s40 = int_to_ptr.vmem [resolvable:$true] %s39
      %42 = dma.hbm_to_vmem [thread:$0]  %s2, 80, %s40, [#allocation6]
    $region13: #{tpu_custom_call.1} parent=1 // pred_fallthru
      _
    // Predicated region
    $region14: #{tpu_custom_call.1} parent=1 // pred_check
      _
    $region15: #{tpu_custom_call.1} parent=1 // pred_check_branch
      %44 = sbr.rel (0) target = $region17
    $region16: #{tpu_custom_call.1} parent=1 // pred_region
      %45 = dma.done [#allocation3], 128
    $region17: #{tpu_custom_call.1} parent=1 // pred_fallthru
      _
    // Predicated region
    $region18: #{tpu_custom_call.1} parent=1 // pred_check
      _
    $region19: #{tpu_custom_call.1} parent=1 // pred_check_branch
      %47 = sbr.rel (0) target = $region21
    $region20: #{tpu_custom_call.1} parent=1 // pred_region
      %48 = dma.done [#allocation6], 2560
    $region21: #{tpu_custom_call.1} parent=1 // pred_fallthru
      _
    // Predicated region
    $region22: #{tpu_custom_call.1} parent=1 // pred_check
      _
    $region23: #{tpu_custom_call.1} parent=1 // pred_check_branch
      %50 = sbr.rel (0) target = $region25
    $region24: #{tpu_custom_call.1} parent=1 // pred_region
      %51 = dma.done [#allocation6], 80
    $region25: #{tpu_custom_call.1} parent=1 // pred_fallthru
      _
    %v52 = vld [vmem:[#allocation2] sm:$0xff]
    %v53 = vld [vmem:[#allocation5] sm:$0xff]
    %v54 = vld [vmem:[#allocation5 + $0x8] sm:$0xff]
    %v55 = vld [vmem:[#allocation5 + $0x10] sm:$0xff]
    %v56 = vld [vmem:[#allocation5 + $0x18] sm:$0xff]
    %v57 = vld [vmem:[#allocation5 + $0x20] sm:$0xff]
    %v58 = vld [vmem:[#allocation5 + $0x28] sm:$0xff]
    %v59 = vld [vmem:[#allocation5 + $0x30] sm:$0xff]
    %v60 = vld [vmem:[#allocation5 + $0x38] sm:$0xff]
    %v61 = vld [vmem:[#allocation5 + $0x40] sm:$0xff]
    %v62 = vld [vmem:[#allocation5 + $0x48] sm:$0xff]
    %v63 = vld [vmem:[#allocation5 + $0x50] sm:$0xff]
    %v64 = vld [vmem:[#allocation5 + $0x58] sm:$0xff]
    %v65 = vld [vmem:[#allocation5 + $0x60] sm:$0xff]
    %v66 = vld [vmem:[#allocation5 + $0x68] sm:$0xff]
    %v67 = vld [vmem:[#allocation5 + $0x70] sm:$0xff]
    %v68 = vld [vmem:[#allocation5 + $0x78] sm:$0xff]
    %v69 = vld [vmem:[#allocation5 + $0x80] sm:$0xff]
    %v70 = vld [vmem:[#allocation5 + $0x88] sm:$0xff]
    %v71 = vld [vmem:[#allocation5 + $0x90] sm:$0xff]
    %v72 = vld [vmem:[#allocation5 + $0x98] sm:$0xff]
    %v73 = vld [vmem:[#allocation7] sm:$0x1f]
    %v75 = vlaneseq
    %v76 = vshrl.u32 %v75, 7
    %v77 = vsub.s32 0, %v76
    %v78 = vrot.slane %v73, %v77
    %v79 = vlaneseq
    %v80 = vshrl.u32 %v79, 7
    %v81 = vsub.s32 1, %v80
    %v82 = vrot.slane %v73, %v81
    %v83 = vlaneseq
    %v84 = vshrl.u32 %v83, 7
    %v85 = vsub.s32 2, %v84
    %v86 = vrot.slane %v73, %v85
    %v87 = vlaneseq
    %v88 = vshrl.u32 %v87, 7
    %v89 = vsub.s32 3, %v88
    %v90 = vrot.slane %v73, %v89
    %v91 = vlaneseq
    %v92 = vshrl.u32 %v91, 7
    %v93 = vsub.s32 4, %v92
    %v94 = vrot.slane %v73, %v93
    %vm100 = vcmask 261120
    %v102 = vsel %vm100, %v52, 0
    %104 = vmatprep.subr.mxu0 0.0
    %105 = vmatpush1.msra.mxu0 0.0
    %106 = vmatprep.subr.mxu0 0.0
    %107 = vmatpush1.msra.mxu0 0.0
    %108 = vmatprep.subr.mxu0 0.0
    %109 = vmatpush1.msra.mxu0 0.0
    %110 = vmatprep.subr.mxu0 0.0
    %111 = vmatpush1.msra.mxu0 0.0
    %112 = vmatprep.subr.mxu0 0.0
    %113 = vmatpush1.msra.mxu0 0.0
    %114 = vmatprep.subr.mxu0 0.0
    %115 = vmatpush1.msra.mxu0 0.0
    %116 = vmatprep.subr.mxu0 0.0
    %117 = vmatpush1.msra.mxu0 0.0
    %118 = vmatprep.subr.mxu0 0.0
    %119 = vmatpush1.msra.mxu0 0.0
    %120 = vmatprep.subr.mxu0 0.0
    %121 = vmatpush1.msra.mxu0 0.0
    %122 = vmatprep.subr.mxu0 0.0
    %123 = vmatpush1.msra.mxu0 0.0
    %124 = vmatprep.subr.mxu0 0.0
    %125 = vmatpush1.msra.mxu0 0.0
    %126 = vmatprep.subr.mxu0 0.0
    %127 = vmatpush1.msra.mxu0 0.0
    %128 = vmatprep.subr.mxu0 %v69
    %129 = vmatpush1.msra.mxu0 %v68
    %130 = vmatprep.subr.mxu0 %v64
    %131 = vmatpush1.msra.mxu0 %v63
    %132 = vmatprep.subr.mxu0 %v59
    %133 = vmatpush1.msra.mxu0 %v58
    %134 = vmatprep.subr.mxu0 %v54
    %135 = vmatpush1.msra.mxu0 %v53
    %136 = vmatprep.subr.mxu0 0.0
    %137 = vmatpush2.msra.mxu0 0.0
    %138 = vmatprep.subr.mxu0 0.0
    %139 = vmatpush2.msra.mxu0 0.0
    %140 = vmatprep.subr.mxu0 0.0
    %141 = vmatpush2.msra.mxu0 0.0
    %142 = vmatprep.subr.mxu0 0.0
    %143 = vmatpush2.msra.mxu0 0.0
    %144 = vmatprep.subr.mxu0 0.0
    %145 = vmatpush2.msra.mxu0 0.0
    %146 = vmatprep.subr.mxu0 0.0
    %147 = vmatpush2.msra.mxu0 0.0
    %148 = vmatprep.subr.mxu0 0.0
    %149 = vmatpush2.msra.mxu0 0.0
    %150 = vmatprep.subr.mxu0 0.0
    %151 = vmatpush2.msra.mxu0 0.0
    %152 = vmatprep.subr.mxu0 0.0
    %153 = vmatpush2.msra.mxu0 0.0
    %154 = vmatprep.subr.mxu0 0.0
    %155 = vmatpush2.msra.mxu0 0.0
    %156 = vmatprep.subr.mxu0 0.0
    %157 = vmatpush2.msra.mxu0 0.0
    %158 = vmatprep.subr.mxu0 0.0
    %159 = vmatpush2.msra.mxu0 0.0
    %160 = vmatprep.subr.mxu0 0.0
    %161 = vmatpush2.msra.mxu0 0.0
    %162 = vmatprep.subr.mxu0 0.0
    %163 = vmatpush2.msra.mxu0 0.0
    %164 = vmatprep.subr.mxu0 0.0
    %165 = vmatpush2.msra.mxu0 0.0
    %166 = vmatprep.subr.mxu0 0.0
    %167 = vmatpush2.msra.mxu0 0.0
    %168 = vmatprep.mubr.f32.mxu0 0.0
    %169 = vmatmul.mubr.f32.gmra.mxu0 %v102
    %v170 = vpop.f32.mrf.mxu0
    %v171 = vadd.f32 %v78, %v170
    %v172 = vpop.f32.mrf.mxu0
    %v173 = vadd.f32 %v82, %v172
    %174 = vdwg.mxu0
    %175 = vmatprep.subr.mxu0 0.0
    %176 = vmatpush1.msra.mxu0 0.0
    %177 = vmatprep.subr.mxu0 0.0
    %178 = vmatpush1.msra.mxu0 0.0
    %179 = vmatprep.subr.mxu0 0.0
    %180 = vmatpush1.msra.mxu0 0.0
    %181 = vmatprep.subr.mxu0 0.0
    %182 = vmatpush1.msra.mxu0 0.0
    %183 = vmatprep.subr.mxu0 0.0
    %184 = vmatpush1.msra.mxu0 0.0
    %185 = vmatprep.subr.mxu0 0.0
    %186 = vmatpush1.msra.mxu0 0.0
    %187 = vmatprep.subr.mxu0 0.0
    %188 = vmatpush1.msra.mxu0 0.0
    %189 = vmatprep.subr.mxu0 0.0
    %190 = vmatpush1.msra.mxu0 0.0
    %191 = vmatprep.subr.mxu0 0.0
    %192 = vmatpush1.msra.mxu0 0.0
    %193 = vmatprep.subr.mxu0 0.0
    %194 = vmatpush1.msra.mxu0 0.0
    %195 = vmatprep.subr.mxu0 0.0
    %196 = vmatpush1.msra.mxu0 0.0
    %197 = vmatprep.subr.mxu0 0.0
    %198 = vmatpush1.msra.mxu0 0.0
    %199 = vmatprep.subr.mxu0 %v71
    %200 = vmatpush1.msra.mxu0 %v70
    %201 = vmatprep.subr.mxu0 %v66
    %202 = vmatpush1.msra.mxu0 %v65
    %203 = vmatprep.subr.mxu0 %v61
    %204 = vmatpush1.msra.mxu0 %v60
    %205 = vmatprep.subr.mxu0 %v56
    %206 = vmatpush1.msra.mxu0 %v55
    %207 = vmatprep.subr.mxu0 0.0
    %208 = vmatpush2.msra.mxu0 0.0
    %209 = vmatprep.subr.mxu0 0.0
    %210 = vmatpush2.msra.mxu0 0.0
    %211 = vmatprep.subr.mxu0 0.0
    %212 = vmatpush2.msra.mxu0 0.0
    %213 = vmatprep.subr.mxu0 0.0
    %214 = vmatpush2.msra.mxu0 0.0
    %215 = vmatprep.subr.mxu0 0.0
    %216 = vmatpush2.msra.mxu0 0.0
    %217 = vmatprep.subr.mxu0 0.0
    %218 = vmatpush2.msra.mxu0 0.0
    %219 = vmatprep.subr.mxu0 0.0
    %220 = vmatpush2.msra.mxu0 0.0
    %221 = vmatprep.subr.mxu0 0.0
    %222 = vmatpush2.msra.mxu0 0.0
    %223 = vmatprep.subr.mxu0 0.0
    %224 = vmatpush2.msra.mxu0 0.0
    %225 = vmatprep.subr.mxu0 0.0
    %226 = vmatpush2.msra.mxu0 0.0
    %227 = vmatprep.subr.mxu0 0.0
    %228 = vmatpush2.msra.mxu0 0.0
    %229 = vmatprep.subr.mxu0 0.0
    %230 = vmatpush2.msra.mxu0 0.0
    %231 = vmatprep.subr.mxu0 0.0
    %232 = vmatpush2.msra.mxu0 0.0
    %233 = vmatprep.subr.mxu0 0.0
    %234 = vmatpush2.msra.mxu0 0.0
    %235 = vmatprep.subr.mxu0 0.0
    %236 = vmatpush2.msra.mxu0 0.0
    %237 = vmatprep.subr.mxu0 0.0
    %238 = vmatpush2.msra.mxu0 0.0
    %239 = vmatprep.mubr.f32.mxu0 0.0
    %240 = vmatmul.mubr.f32.gmra.mxu0 %v102
    %v241 = vpop.f32.mrf.mxu0
    %v242 = vadd.f32 %v86, %v241
    %v243 = vpop.f32.mrf.mxu0
    %v244 = vadd.f32 %v90, %v243
    %245 = vdwg.mxu0
    %246 = vmatprep.subr.mxu0 0.0
    %247 = vmatpush1.msra.mxu0 0.0
    %248 = vmatprep.subr.mxu0 0.0
    %249 = vmatpush1.msra.mxu0 0.0
    %250 = vmatprep.subr.mxu0 0.0
    %251 = vmatpush1.msra.mxu0 0.0
    %252 = vmatprep.subr.mxu0 0.0
    %253 = vmatpush1.msra.mxu0 0.0
    %254 = vmatprep.subr.mxu0 0.0
    %255 = vmatpush1.msra.mxu0 0.0
    %256 = vmatprep.subr.mxu0 0.0
    %257 = vmatpush1.msra.mxu0 0.0
    %258 = vmatprep.subr.mxu0 0.0
    %259 = vmatpush1.msra.mxu0 0.0
    %260 = vmatprep.subr.mxu0 0.0
    %261 = vmatpush1.msra.mxu0 0.0
    %262 = vmatprep.subr.mxu0 0.0
    %263 = vmatpush1.msra.mxu0 0.0
    %264 = vmatprep.subr.mxu0 0.0
    %265 = vmatpush1.msra.mxu0 0.0
    %266 = vmatprep.subr.mxu0 0.0
    %267 = vmatpush1.msra.mxu0 0.0
    %268 = vmatprep.subr.mxu0 0.0
    %269 = vmatpush1.msra.mxu0 0.0
    %270 = vmatprep.subr.mxu0 0.0
    %271 = vmatpush1.msra.mxu0 %v72
    %272 = vmatprep.subr.mxu0 0.0
    %273 = vmatpush1.msra.mxu0 %v67
    %274 = vmatprep.subr.mxu0 0.0
    %275 = vmatpush1.msra.mxu0 %v62
    %276 = vmatprep.subr.mxu0 0.0
    %277 = vmatpush1.msra.mxu0 %v57
    %278 = vmatprep.subr.mxu0 0.0
    %279 = vmatpush2.msra.mxu0 0.0
    %280 = vmatprep.subr.mxu0 0.0
    %281 = vmatpush2.msra.mxu0 0.0
    %282 = vmatprep.subr.mxu0 0.0
    %283 = vmatpush2.msra.mxu0 0.0
    %284 = vmatprep.subr.mxu0 0.0
    %285 = vmatpush2.msra.mxu0 0.0
    %286 = vmatprep.subr.mxu0 0.0
    %287 = vmatpush2.msra.mxu0 0.0
    %288 = vmatprep.subr.mxu0 0.0
    %289 = vmatpush2.msra.mxu0 0.0
    %290 = vmatprep.subr.mxu0 0.0
    %291 = vmatpush2.msra.mxu0 0.0
    %292 = vmatprep.subr.mxu0 0.0
    %293 = vmatpush2.msra.mxu0 0.0
    %294 = vmatprep.subr.mxu0 0.0
    %295 = vmatpush2.msra.mxu0 0.0
    %296 = vmatprep.subr.mxu0 0.0
    %297 = vmatpush2.msra.mxu0 0.0
    %298 = vmatprep.subr.mxu0 0.0
    %299 = vmatpush2.msra.mxu0 0.0
    %300 = vmatprep.subr.mxu0 0.0
    %301 = vmatpush2.msra.mxu0 0.0
    %302 = vmatprep.subr.mxu0 0.0
    %303 = vmatpush2.msra.mxu0 0.0
    %304 = vmatprep.subr.mxu0 0.0
    %305 = vmatpush2.msra.mxu0 0.0
    %306 = vmatprep.subr.mxu0 0.0
    %307 = vmatpush2.msra.mxu0 0.0
    %308 = vmatprep.subr.mxu0 0.0
    %309 = vmatpush2.msra.mxu0 0.0
    %310 = vmatprep.mubr.f32.mxu0 0.0
    %311 = vmatmul.mubr.f32.gmra.mxu0 %v102
    %v312 = vpop.f32.mrf.mxu0
    %v313 = vadd.f32 %v94, %v312
    %v314 = vpop.f32.mrf.mxu0
    %315 = vdwg.mxu0
    %v316 = vmax.f32 %v171, 0.0
    %v317 = vmax.f32 %v173, 0.0
    %v318 = vmax.f32 %v242, 0.0
    %v319 = vmax.f32 %v244, 0.0
    %v320 = vmax.f32 %v313, 0.0
    %v321 = vadd.f32 %v316, %v317
    %v322 = vadd.f32 %v321, %v318
    %v323 = vadd.f32 %v322, %v319
    %v324 = vadd.f32 %v323, %v320
    %v325 = vmul.f32 %v324, 0.2
    %326 = vst [vmem:[#allocation8] sm:$0xff] %v325
    // Predicated region
    $region26: #{tpu_custom_call.1} parent=1 // pred_check
      _
    $region27: #{tpu_custom_call.1} parent=1 // pred_check_branch
      %328 = sbr.rel (0) target = $region29
    $region28: #{tpu_custom_call.1} parent=1 // pred_region
      %s330 = ssub.s32 128, 128
      %331 = vsyncadd [#allocation4], %s330
      %s333 = sshll.u32 [#allocation8], 4
      %s334 = int_to_ptr.vmem [resolvable:$true] %s333
      %336 = dma.vmem_to_hbm [thread:$0]  %s334, 128, %s3, [#allocation4]
    $region29: #{tpu_custom_call.1} parent=1 // pred_fallthru
      _
    // Predicated region
    $region30: #{tpu_custom_call.1} parent=1 // pred_check
      _
    $region31: #{tpu_custom_call.1} parent=1 // pred_check_branch
      %338 = sbr.rel (0) target = $region33
    $region32: #{tpu_custom_call.1} parent=1 // pred_region
      %339 = dma.done [#allocation4], 128
    $region33: #{tpu_custom_call.1} parent=1 // pred_fallthru
      _
    %340 = vsyncpa [#allocation3], 1
    %341 = vsyncpa [#allocation6], 1
    %342 = vsyncpa [#allocation4], 1

</llo_original>
